<compile_context>
chip_gen: v7x
topology: tpu7x:2x2x1
jax: 0.10.0
libtpu: 0.0.40
codegen_flags: <defaults>
</compile_context>

<pallas_src>
import math

import jax
import jax.numpy as jnp
from jax.experimental import pallas as pl
from jax.experimental.pallas import tpu as pltpu

MODEL_DIM = 512
HIDDEN = 128
LABELS = 10
LANE_PAD = 128          # lane-dense padded label dim


def _round_up(x, m):
    return ((x + m - 1) // m) * m


def _probe_kernel(x_ref, w1_ref, b1_ref, w2_ref, b2_ref, o_ref):
    # x_ref:  (tm, 512)     current batch tile (f32)
    # w1_ref: (512, 128)    fc1 weight, pre-transposed, z1 folded in
    # b1_ref: (1, 128)
    # w2_ref: (128, 128)    fc2 weight, pre-transposed, z2 folded in, zero-padded 10 -> 128
    # b2_ref: (1, 128)      zero-padded 10 -> 128
    # o_ref:  (tm, 128)     lane-dense output block
    h = jnp.dot(x_ref[...], w1_ref[...], preferred_element_type=jnp.float32) + b1_ref[...]
    h = jnp.maximum(h, 0.0)
    y = jnp.dot(h, w2_ref[...], preferred_element_type=jnp.float32) + b2_ref[...]
    o_ref[...] = y.astype(o_ref.dtype)


def bayes_probe_forward(x, params, *, tm=512):
    """x: any shape (..., 512) -> flattened to (N, 512), returns (N, 10)."""
    z1, w1t, b1, z2, w2t, b2 = params

    x2 = x.reshape(-1, MODEL_DIM).astype(jnp.float32)
    n = x2.shape[0]

    # Fold the multiplicative posterior means into the weights (one-time,
    # O(D_in * D_out)):  (x * z) @ W  ==  x @ (diag(z) @ W)
    w1_eff = z1.reshape(MODEL_DIM, 1) * w1t                     # (512, 128)
    w2_eff = z2.reshape(HIDDEN, 1) * w2t                        # (128, 10)

    # Zero-pad the label dim to a full 128-lane tile for lane-dense stores.
    w2_pad = jnp.zeros((HIDDEN, LANE_PAD), jnp.float32).at[:, :LABELS].set(w2_eff)
    b2_pad = jnp.zeros((1, LANE_PAD), jnp.float32).at[:, :LABELS].set(b2)

    # Tile choice: large tile for throughput, but never larger than the
    # (sublane-rounded) row count so tiny inputs don't waste compute.
    tm_eff = min(tm, _round_up(n, 8))
    n_pad = _round_up(n, tm_eff)
    if n_pad != n:
        x2 = jnp.pad(x2, ((0, n_pad - n), (0, 0)))

    grid = (n_pad // tm_eff,)
    out = pl.pallas_call(
        _probe_kernel,
        out_shape=jax.ShapeDtypeStruct((n_pad, LANE_PAD), jnp.float32),
        grid_spec=pltpu.PrefetchScalarGridSpec(
            num_scalar_prefetch=0,
            grid=grid,
            in_specs=[
                pl.BlockSpec((tm_eff, MODEL_DIM), lambda i: (i, 0)),     # x tile
                pl.BlockSpec((MODEL_DIM, HIDDEN), lambda i: (0, 0)),     # W1 (z1 folded)
                pl.BlockSpec((1, HIDDEN), lambda i: (0, 0)),             # b1
                pl.BlockSpec((HIDDEN, LANE_PAD), lambda i: (0, 0)),      # W2 (z2 folded, padded)
                pl.BlockSpec((1, LANE_PAD), lambda i: (0, 0)),           # b2 (padded)
            ],
            out_specs=pl.BlockSpec((tm_eff, LANE_PAD), lambda i: (i, 0)),
        ),
        compiler_params=pltpu.CompilerParams(
            dimension_semantics=("parallel",),
            vmem_limit_bytes=64 << 20,
        ),
    )(x2, w1_eff, b1, w2_pad, b2_pad)

    return out[:n, :LABELS]


def init_params(key):
    """Deterministic parameter init matching LinearGroupNJ shapes:
       fc1: weight_mu (128, 512), bias_mu (128,), z_mu (512,)
       fc2: weight_mu (10, 128),  bias_mu (10,),  z_mu (128,)
    (z_mu is initialized ~1 in the original code; we add tiny deterministic noise.)
    """
    k1, k2, k3, k4, k5, k6 = jax.random.split(key, 6)

    def kaiming(k, fan_in, shape):
        std = 1.0 / math.sqrt(fan_in)
        return jax.random.uniform(k, shape, jnp.float32, -std, std)

    w1 = kaiming(k1, MODEL_DIM, (HIDDEN, MODEL_DIM))
    b1 = kaiming(k2, MODEL_DIM, (HIDDEN,))
    z1 = 1.0 + 0.01 * jax.random.normal(k3, (MODEL_DIM,), jnp.float32)

    w2 = kaiming(k4, HIDDEN, (LABELS, HIDDEN))
    b2 = kaiming(k5, HIDDEN, (LABELS,))
    z2 = 1.0 + 0.01 * jax.random.normal(k6, (HIDDEN,), jnp.float32)

    # Pre-transpose weights and lift 1-D params to (1, D) for VMEM tiles.
    return (
        z1.reshape(1, MODEL_DIM),
        w1.T,                      # (512, 128)
        b1.reshape(1, HIDDEN),
        z2.reshape(1, HIDDEN),
        w2.T,                      # (128, 10)
        b2.reshape(1, LABELS),
    )


def reference_forward(x, params):
    z1, w1t, b1, z2, w2t, b2 = params
    x2 = x.reshape(-1, MODEL_DIM)
    h = jnp.maximum((x2 * z1) @ w1t + b1, 0.0)
    return (h * z2) @ w2t + b2


if __name__ == "__main__":
    key = jax.random.PRNGKey(0)
    kx, kp = jax.random.split(key)

    # Small "batch of sentences": batch=2, seq=8, model_dim=512 -> N=16 rows.
    x = jax.random.normal(kx, (2, 8, MODEL_DIM), jnp.float32)
    params = init_params(kp)

    out = bayes_probe_forward(x, params)
    out = jax.block_until_ready(out)

    ref = reference_forward(x, params)
    assert out.shape == (16, LABELS)
    assert jnp.allclose(out, ref, atol=1e-4, rtol=1e-4), "mismatch vs reference"

    print("KERNEL_OK")
</pallas_src>

<mosaic_0001>
module attributes {stable_mosaic.version = 11 : i64} {
  func.func @_probe_kernel(%arg0: i32, %arg1: memref<16x512xf32, #tpu.memory_space<vmem>>, %arg2: memref<512x128xf32, #tpu.memory_space<vmem>>, %arg3: memref<1x128xf32, #tpu.memory_space<vmem>>, %arg4: memref<128x128xf32, #tpu.memory_space<vmem>>, %arg5: memref<1x128xf32, #tpu.memory_space<vmem>>, %arg6: memref<16x128xf32, #tpu.memory_space<vmem>>) attributes {dimension_semantics = [#tpu.dimension_semantics<parallel>], iteration_bounds = array<i64: 1>, scalar_prefetch = 0 : i64, scratch_operands = 0 : i64, tpu.core_type = #tpu.core_type<tc>, window_params = [{transform_indices = @transform_0, window_bounds = array<i64: 16, 512>}, {pipeline_mode = #tpu.pipeline_mode<synchronous>, transform_indices = @transform_1, window_bounds = array<i64: 512, 128>}, {pipeline_mode = #tpu.pipeline_mode<synchronous>, transform_indices = @transform_2, window_bounds = array<i64: 1, 128>}, {pipeline_mode = #tpu.pipeline_mode<synchronous>, transform_indices = @transform_3, window_bounds = array<i64: 128, 128>}, {pipeline_mode = #tpu.pipeline_mode<synchronous>, transform_indices = @transform_4, window_bounds = array<i64: 1, 128>}, {transform_indices = @transform_5, window_bounds = array<i64: 16, 128>}]} {
    %c0 = arith.constant 0 : index
    %c0_0 = arith.constant 0 : index
    %0 = vector.load %arg1[%c0, %c0_0] : memref<16x512xf32, #tpu.memory_space<vmem>>, vector<16x512xf32>
    %c0_1 = arith.constant 0 : index
    %c0_2 = arith.constant 0 : index
    %1 = vector.load %arg2[%c0_1, %c0_2] : memref<512x128xf32, #tpu.memory_space<vmem>>, vector<512x128xf32>
    %cst = arith.constant dense<0.000000e+00> : vector<16x128xf32>
    %2 = tpu.matmul %0, %1, %cst {dimension_numbers = #tpu.dot_dimension_numbers<[1], [0], [0], [1], [0, 0, 1, 1], [], []>} : vector<16x512xf32>, vector<512x128xf32>, vector<16x128xf32> -> vector<16x128xf32>
    %c0_3 = arith.constant 0 : index
    %c0_4 = arith.constant 0 : index
    %3 = vector.load %arg3[%c0_3, %c0_4] : memref<1x128xf32, #tpu.memory_space<vmem>>, vector<1x128xf32>
    %4 = vector.broadcast %3 : vector<1x128xf32> to vector<16x128xf32>
    %5 = arith.addf %2, %4 : vector<16x128xf32>
    %cst_5 = arith.constant 0.000000e+00 : f32
    %6 = vector.broadcast %cst_5 : f32 to vector<16x128xf32>
    %7 = arith.maximumf %5, %6 : vector<16x128xf32>
    %c0_6 = arith.constant 0 : index
    %c0_7 = arith.constant 0 : index
    %8 = vector.load %arg4[%c0_6, %c0_7] : memref<128x128xf32, #tpu.memory_space<vmem>>, vector<128x128xf32>
    %cst_8 = arith.constant dense<0.000000e+00> : vector<16x128xf32>
    %9 = tpu.matmul %7, %8, %cst_8 {dimension_numbers = #tpu.dot_dimension_numbers<[1], [0], [0], [1], [0, 0, 1, 1], [], []>} : vector<16x128xf32>, vector<128x128xf32>, vector<16x128xf32> -> vector<16x128xf32>
    %c0_9 = arith.constant 0 : index
    %c0_10 = arith.constant 0 : index
    %10 = vector.load %arg5[%c0_9, %c0_10] : memref<1x128xf32, #tpu.memory_space<vmem>>, vector<1x128xf32>
    %11 = vector.broadcast %10 : vector<1x128xf32> to vector<16x128xf32>
    %12 = arith.addf %9, %11 : vector<16x128xf32>
    %c0_11 = arith.constant 0 : index
    %c0_12 = arith.constant 0 : index
    %13 = vector.load %arg6[%c0_11, %c0_12] : memref<16x128xf32, #tpu.memory_space<vmem>>, vector<16x128xf32>
    tpu.vector_store %arg6[%c0_11, %c0_12], %12 {strides = array<i32>} : memref<16x128xf32, #tpu.memory_space<vmem>>, vector<16x128xf32>,
    return
  }
  func.func @transform_0(%arg0: i32) -> (i32, i32) {
    %c0_i32 = arith.constant 0 : i32
    %c0_i32_0 = arith.constant 0 : i32
    return %arg0, %c0_i32 : i32, i32
  }
  func.func @transform_1(%arg0: i32) -> (i32, i32) {
    %c0_i32 = arith.constant 0 : i32
    %c0_i32_0 = arith.constant 0 : i32
    %c0_i32_1 = arith.constant 0 : i32
    return %c0_i32, %c0_i32_0 : i32, i32
  }
  func.func @transform_2(%arg0: i32) -> (i32, i32) {
    %c0_i32 = arith.constant 0 : i32
    %c0_i32_0 = arith.constant 0 : i32
    %c0_i32_1 = arith.constant 0 : i32
    return %c0_i32, %c0_i32_0 : i32, i32
  }
  func.func @transform_3(%arg0: i32) -> (i32, i32) {
    %c0_i32 = arith.constant 0 : i32
    %c0_i32_0 = arith.constant 0 : i32
    %c0_i32_1 = arith.constant 0 : i32
    return %c0_i32, %c0_i32_0 : i32, i32
  }
  func.func @transform_4(%arg0: i32) -> (i32, i32) {
    %c0_i32 = arith.constant 0 : i32
    %c0_i32_0 = arith.constant 0 : i32
    %c0_i32_1 = arith.constant 0 : i32
    return %c0_i32, %c0_i32_0 : i32, i32
  }
  func.func @transform_5(%arg0: i32) -> (i32, i32) {
    %c0_i32 = arith.constant 0 : i32
    %c0_i32_0 = arith.constant 0 : i32
    return %arg0, %c0_i32 : i32, i32
  }
}

</mosaic_0001>

<llo_original>
// kernel: tpu_custom_call.1
$region0: #{tpu_custom_call.1}
  #allocation0 [shape = 'u32[]', space=smem, size = 0x4, offset = 0x4, fixed_abs, tag = 'smem constant byte address 0x4 - core index']
  #allocation1 [shape = 'u32[144,128]{1,0:T(1,128)}', space=vmem, size = 0x12000, scoped, tag = 'internal scratch']
  %s0 = inlined_call_operand.hbm [shape: f32[16,512], index: 0, kind: input, shape index: {}]
  %s1 = inlined_call_operand.hbm [shape: f32[512,128], index: 1, kind: input, shape index: {}]
  %s2 = inlined_call_operand.hbm [shape: f32[1,128], index: 2, kind: input, shape index: {}]
  %s3 = inlined_call_operand.hbm [shape: f32[128,128], index: 3, kind: input, shape index: {}]
  %s4 = inlined_call_operand.hbm [shape: f32[1,128], index: 4, kind: input, shape index: {}]
  %s5 = inlined_call_operand.hbm [shape: f32[16,128], index: 5, kind: output, shape index: {}]
  %s6 = sld [smem:[#allocation0]]
  $region50: #{tpu_custom_call.1} parent=0
    _
  %s8 = ssub.s32 1, %s6
  %s9 = scalar_select 0, %s8, %s6
  $region1: #{tpu_custom_call.1} parent=0
    #allocation2 [shape = 'u8[32768]{0}', space=vmem, size = 0x8000, scoped, tag = 'input window, operand 0, single buffered']
    #allocation3 [shape = 's32[1]{0}', space=sflag, size = 0x4, scoped, tag = 'scoped memory for tpu_custom_call.1']
    #allocation4 [shape = 's32[1]{0}', space=sflag, size = 0x4, scoped, tag = 'scoped memory for tpu_custom_call.1']
    #allocation5 [shape = 'u8[262144]{0}', space=vmem, size = 0x40000, scoped, tag = 'input window, operand 1, single buffered']
    #allocation6 [shape = 's32[1]{0}', space=sflag, size = 0x4, scoped, tag = 'scoped memory for tpu_custom_call.1']
    #allocation7 [shape = 'u8[512]{0}', space=vmem, size = 0x400, scoped, tag = 'input window, operand 2, single buffered']
    #allocation8 [shape = 'u8[65536]{0}', space=vmem, size = 0x10000, scoped, tag = 'input window, operand 3, single buffered']
    #allocation9 [shape = 's32[1]{0}', space=sflag, size = 0x4, scoped, tag = 'scoped memory for tpu_custom_call.1']
    #allocation10 [shape = 'u8[512]{0}', space=vmem, size = 0x400, scoped, tag = 'input window, operand 4, single buffered']
    #allocation11 [shape = 'u8[8192]{0}', space=vmem, size = 0x2000, scoped, tag = 'output window, operand 0, single buffered']
    %10 = vsyncpa [#allocation3], 0
    %11 = vsyncpa [#allocation6], 0
    %12 = vsyncpa [#allocation9], 0
    %13 = vsyncpa [#allocation4], 0
    // Predicated region
    $region2: #{tpu_custom_call.1} parent=1 // pred_check
      _
    $region3: #{tpu_custom_call.1} parent=1 // pred_check_branch
      %15 = sbr.rel (0) target = $region5
    $region4: #{tpu_custom_call.1} parent=1 // pred_region
      %s17 = ssub.s32 1024, 1024
      %18 = vsyncadd [#allocation3], %s17
      %s19 = sshll.u32 [#allocation2], 4
      %s20 = int_to_ptr.vmem [resolvable:$true] %s19
      %25 = dma.hbm_to_vmem [thread:$0]  %s0, 1024, %s20, [#allocation3], 512, 512, 32
    $region5: #{tpu_custom_call.1} parent=1 // pred_fallthru
      _
    // Predicated region
    $region6: #{tpu_custom_call.1} parent=1 // pred_check
      _
    $region7: #{tpu_custom_call.1} parent=1 // pred_check_branch
      %27 = sbr.rel (0) target = $region9
    $region8: #{tpu_custom_call.1} parent=1 // pred_region
      %s29 = ssub.s32 8192, 8192
      %30 = vsyncadd [#allocation6], %s29
      %s31 = sshll.u32 [#allocation5], 4
      %s32 = int_to_ptr.vmem [resolvable:$true] %s31
      %37 = dma.hbm_to_vmem [thread:$0]  %s1, 8192, %s32, [#allocation6], 128, 128, 8
    $region9: #{tpu_custom_call.1} parent=1 // pred_fallthru
      _
    // Predicated region
    $region10: #{tpu_custom_call.1} parent=1 // pred_check
      _
    $region11: #{tpu_custom_call.1} parent=1 // pred_check_branch
      %39 = sbr.rel (0) target = $region13
    $region12: #{tpu_custom_call.1} parent=1 // pred_region
      %s41 = ssub.s32 16, 16
      %42 = vsyncadd [#allocation6], %s41
      %s44 = sshll.u32 [#allocation7], 4
      %s45 = int_to_ptr.vmem [resolvable:$true] %s44
      %47 = dma.hbm_to_vmem [thread:$0]  %s2, 16, %s45, [#allocation6]
    $region13: #{tpu_custom_call.1} parent=1 // pred_fallthru
      _
    // Predicated region
    $region14: #{tpu_custom_call.1} parent=1 // pred_check
      _
    $region15: #{tpu_custom_call.1} parent=1 // pred_check_branch
      %49 = sbr.rel (0) target = $region17
    $region16: #{tpu_custom_call.1} parent=1 // pred_region
      %s51 = ssub.s32 2048, 2048
      %52 = vsyncadd [#allocation9], %s51
      %s53 = sshll.u32 [#allocation8], 4
      %s54 = int_to_ptr.vmem [resolvable:$true] %s53
      %59 = dma.hbm_to_vmem [thread:$0]  %s3, 2048, %s54, [#allocation9], 128, 128, 8
    $region17: #{tpu_custom_call.1} parent=1 // pred_fallthru
      _
    // Predicated region
    $region18: #{tpu_custom_call.1} parent=1 // pred_check
      _
    $region19: #{tpu_custom_call.1} parent=1 // pred_check_branch
      %61 = sbr.rel (0) target = $region21
    $region20: #{tpu_custom_call.1} parent=1 // pred_region
      %s63 = ssub.s32 16, 16
      %64 = vsyncadd [#allocation9], %s63
      %s66 = sshll.u32 [#allocation10], 4
      %s67 = int_to_ptr.vmem [resolvable:$true] %s66
      %69 = dma.hbm_to_vmem [thread:$0]  %s4, 16, %s67, [#allocation9]
    $region21: #{tpu_custom_call.1} parent=1 // pred_fallthru
      _
    // Predicated region
    $region22: #{tpu_custom_call.1} parent=1 // pred_check
      _
    $region23: #{tpu_custom_call.1} parent=1 // pred_check_branch
      %71 = sbr.rel (0) target = $region25
    $region24: #{tpu_custom_call.1} parent=1 // pred_region
      %72 = dma.done [#allocation3], 1024
    $region25: #{tpu_custom_call.1} parent=1 // pred_fallthru
      _
    // Predicated region
    $region26: #{tpu_custom_call.1} parent=1 // pred_check
      _
    $region27: #{tpu_custom_call.1} parent=1 // pred_check_branch
      %74 = sbr.rel (0) target = $region29
    $region28: #{tpu_custom_call.1} parent=1 // pred_region
      %75 = dma.done [#allocation6], 8192
    $region29: #{tpu_custom_call.1} parent=1 // pred_fallthru
      _
    // Predicated region
    $region30: #{tpu_custom_call.1} parent=1 // pred_check
      _
    $region31: #{tpu_custom_call.1} parent=1 // pred_check_branch
      %77 = sbr.rel (0) target = $region33
    $region32: #{tpu_custom_call.1} parent=1 // pred_region
      %78 = dma.done [#allocation6], 16
    $region33: #{tpu_custom_call.1} parent=1 // pred_fallthru
      _
    // Predicated region
    $region34: #{tpu_custom_call.1} parent=1 // pred_check
      _
    $region35: #{tpu_custom_call.1} parent=1 // pred_check_branch
      %80 = sbr.rel (0) target = $region37
    $region36: #{tpu_custom_call.1} parent=1 // pred_region
      %81 = dma.done [#allocation9], 2048
    $region37: #{tpu_custom_call.1} parent=1 // pred_fallthru
      _
    // Predicated region
    $region38: #{tpu_custom_call.1} parent=1 // pred_check
      _
    $region39: #{tpu_custom_call.1} parent=1 // pred_check_branch
      %83 = sbr.rel (0) target = $region41
    $region40: #{tpu_custom_call.1} parent=1 // pred_region
      %84 = dma.done [#allocation9], 16
    $region41: #{tpu_custom_call.1} parent=1 // pred_fallthru
      _
    %v85 = vld [vmem:[#allocation2] sm:$0xff]
    %v86 = vld [vmem:[#allocation2 + $0x8] sm:$0xff]
    %v87 = vld [vmem:[#allocation2 + $0x10] sm:$0xff]
    %v88 = vld [vmem:[#allocation2 + $0x18] sm:$0xff]
    %v89 = vld [vmem:[#allocation2 + $0x20] sm:$0xff]
    %v90 = vld [vmem:[#allocation2 + $0x28] sm:$0xff]
    %v91 = vld [vmem:[#allocation2 + $0x30] sm:$0xff]
    %v92 = vld [vmem:[#allocation2 + $0x38] sm:$0xff]
    %v93 = vld [vmem:[#allocation5] sm:$0xff]
    %v94 = vld [vmem:[#allocation5 + $0x8] sm:$0xff]
    %v95 = vld [vmem:[#allocation5 + $0x10] sm:$0xff]
    %v96 = vld [vmem:[#allocation5 + $0x18] sm:$0xff]
    %v97 = vld [vmem:[#allocation5 + $0x20] sm:$0xff]
    %v98 = vld [vmem:[#allocation5 + $0x28] sm:$0xff]
    %v99 = vld [vmem:[#allocation5 + $0x30] sm:$0xff]
    %v100 = vld [vmem:[#allocation5 + $0x38] sm:$0xff]
    %v101 = vld [vmem:[#allocation5 + $0x40] sm:$0xff]
    %v102 = vld [vmem:[#allocation5 + $0x48] sm:$0xff]
    %v103 = vld [vmem:[#allocation5 + $0x50] sm:$0xff]
    %v104 = vld [vmem:[#allocation5 + $0x58] sm:$0xff]
    %v105 = vld [vmem:[#allocation5 + $0x60] sm:$0xff]
    %v106 = vld [vmem:[#allocation5 + $0x68] sm:$0xff]
    %v107 = vld [vmem:[#allocation5 + $0x70] sm:$0xff]
    %v108 = vld [vmem:[#allocation5 + $0x78] sm:$0xff]
    %v109 = vld [vmem:[#allocation5 + $0x80] sm:$0xff]
    %v110 = vld [vmem:[#allocation5 + $0x88] sm:$0xff]
    %v111 = vld [vmem:[#allocation5 + $0x90] sm:$0xff]
    %v112 = vld [vmem:[#allocation5 + $0x98] sm:$0xff]
    %v113 = vld [vmem:[#allocation5 + $0xa0] sm:$0xff]
    %v114 = vld [vmem:[#allocation5 + $0xa8] sm:$0xff]
    %v115 = vld [vmem:[#allocation5 + $0xb0] sm:$0xff]
    %v116 = vld [vmem:[#allocation5 + $0xb8] sm:$0xff]
    %v117 = vld [vmem:[#allocation5 + $0xc0] sm:$0xff]
    %v118 = vld [vmem:[#allocation5 + $0xc8] sm:$0xff]
    %v119 = vld [vmem:[#allocation5 + $0xd0] sm:$0xff]
    %v120 = vld [vmem:[#allocation5 + $0xd8] sm:$0xff]
    %v121 = vld [vmem:[#allocation5 + $0xe0] sm:$0xff]
    %v122 = vld [vmem:[#allocation5 + $0xe8] sm:$0xff]
    %v123 = vld [vmem:[#allocation5 + $0xf0] sm:$0xff]
    %v124 = vld [vmem:[#allocation5 + $0xf8] sm:$0xff]
    %v125 = vld [vmem:[#allocation5 + $0x100] sm:$0xff]
    %v126 = vld [vmem:[#allocation5 + $0x108] sm:$0xff]
    %v127 = vld [vmem:[#allocation5 + $0x110] sm:$0xff]
    %v128 = vld [vmem:[#allocation5 + $0x118] sm:$0xff]
    %v129 = vld [vmem:[#allocation5 + $0x120] sm:$0xff]
    %v130 = vld [vmem:[#allocation5 + $0x128] sm:$0xff]
    %v131 = vld [vmem:[#allocation5 + $0x130] sm:$0xff]
    %v132 = vld [vmem:[#allocation5 + $0x138] sm:$0xff]
    %v133 = vld [vmem:[#allocation5 + $0x140] sm:$0xff]
    %v134 = vld [vmem:[#allocation5 + $0x148] sm:$0xff]
    %v135 = vld [vmem:[#allocation5 + $0x150] sm:$0xff]
    %v136 = vld [vmem:[#allocation5 + $0x158] sm:$0xff]
    %v137 = vld [vmem:[#allocation5 + $0x160] sm:$0xff]
    %v138 = vld [vmem:[#allocation5 + $0x168] sm:$0xff]
    %v139 = vld [vmem:[#allocation5 + $0x170] sm:$0xff]
    %v140 = vld [vmem:[#allocation5 + $0x178] sm:$0xff]
    %v141 = vld [vmem:[#allocation5 + $0x180] sm:$0xff]
    %v142 = vld [vmem:[#allocation5 + $0x188] sm:$0xff]
    %v143 = vld [vmem:[#allocation5 + $0x190] sm:$0xff]
    %v144 = vld [vmem:[#allocation5 + $0x198] sm:$0xff]
    %v145 = vld [vmem:[#allocation5 + $0x1a0] sm:$0xff]
    %v146 = vld [vmem:[#allocation5 + $0x1a8] sm:$0xff]
    %v147 = vld [vmem:[#allocation5 + $0x1b0] sm:$0xff]
    %v148 = vld [vmem:[#allocation5 + $0x1b8] sm:$0xff]
    %v149 = vld [vmem:[#allocation5 + $0x1c0] sm:$0xff]
    %v150 = vld [vmem:[#allocation5 + $0x1c8] sm:$0xff]
    %v151 = vld [vmem:[#allocation5 + $0x1d0] sm:$0xff]
    %v152 = vld [vmem:[#allocation5 + $0x1d8] sm:$0xff]
    %v153 = vld [vmem:[#allocation5 + $0x1e0] sm:$0xff]
    %v154 = vld [vmem:[#allocation5 + $0x1e8] sm:$0xff]
    %v155 = vld [vmem:[#allocation5 + $0x1f0] sm:$0xff]
    %v156 = vld [vmem:[#allocation5 + $0x1f8] sm:$0xff]
    %v157 = vld [vmem:[#allocation7] sm:$0x1]
    %v159 = vlaneseq
    %v160 = vshrl.u32 %v159, 7
    %v161 = vsub.s32 0, %v160
    %v162 = vrot.slane %v157, %v161
    %164 = vmatprep.subr.mxu0 0.0
    %165 = vmatpush1.msra.mxu0 %v93
    %166 = vmatprep.subr.mxu0 0.0
    %167 = vmatpush1.msra.mxu0 %v94
    %168 = vmatprep.subr.mxu0 0.0
    %169 = vmatpush1.msra.mxu0 %v95
    %170 = vmatprep.subr.mxu0 0.0
    %171 = vmatpush1.msra.mxu0 %v96
    %172 = vmatprep.subr.mxu0 0.0
    %173 = vmatpush1.msra.mxu0 %v97
    %174 = vmatprep.subr.mxu0 0.0
    %175 = vmatpush1.msra.mxu0 %v98
    %176 = vmatprep.subr.mxu0 0.0
    %177 = vmatpush1.msra.mxu0 %v99
    %178 = vmatprep.subr.mxu0 0.0
    %179 = vmatpush1.msra.mxu0 %v100
    %180 = vmatprep.subr.mxu0 0.0
    %181 = vmatpush1.msra.mxu0 %v101
    %182 = vmatprep.subr.mxu0 0.0
    %183 = vmatpush1.msra.mxu0 %v102
    %184 = vmatprep.subr.mxu0 0.0
    %185 = vmatpush1.msra.mxu0 %v103
    %186 = vmatprep.subr.mxu0 0.0
    %187 = vmatpush1.msra.mxu0 %v104
    %188 = vmatprep.subr.mxu0 0.0
    %189 = vmatpush1.msra.mxu0 %v105
    %190 = vmatprep.subr.mxu0 0.0
    %191 = vmatpush1.msra.mxu0 %v106
    %192 = vmatprep.subr.mxu0 0.0
    %193 = vmatpush1.msra.mxu0 %v107
    %194 = vmatprep.subr.mxu0 0.0
    %195 = vmatpush1.msra.mxu0 %v108
    %196 = vmatprep.subr.mxu0 0.0
    %197 = vmatpush1.msra.mxu0 %v109
    %198 = vmatprep.subr.mxu0 0.0
    %199 = vmatpush1.msra.mxu0 %v110
    %200 = vmatprep.subr.mxu0 0.0
    %201 = vmatpush1.msra.mxu0 %v111
    %202 = vmatprep.subr.mxu0 0.0
    %203 = vmatpush1.msra.mxu0 %v112
    %204 = vmatprep.subr.mxu0 0.0
    %205 = vmatpush1.msra.mxu0 %v113
    %206 = vmatprep.subr.mxu0 0.0
    %207 = vmatpush1.msra.mxu0 %v114
    %208 = vmatprep.subr.mxu0 0.0
    %209 = vmatpush1.msra.mxu0 %v115
    %210 = vmatprep.subr.mxu0 0.0
    %211 = vmatpush1.msra.mxu0 %v116
    %212 = vmatprep.subr.mxu0 0.0
    %213 = vmatpush1.msra.mxu0 %v117
    %214 = vmatprep.subr.mxu0 0.0
    %215 = vmatpush1.msra.mxu0 %v118
    %216 = vmatprep.subr.mxu0 0.0
    %217 = vmatpush1.msra.mxu0 %v119
    %218 = vmatprep.subr.mxu0 0.0
    %219 = vmatpush1.msra.mxu0 %v120
    %220 = vmatprep.subr.mxu0 0.0
    %221 = vmatpush1.msra.mxu0 %v121
    %222 = vmatprep.subr.mxu0 0.0
    %223 = vmatpush1.msra.mxu0 %v122
    %224 = vmatprep.subr.mxu0 0.0
    %225 = vmatpush1.msra.mxu0 %v123
    %226 = vmatprep.subr.mxu0 0.0
    %227 = vmatpush1.msra.mxu0 %v124
    %228 = vmatprep.mubr.f32.mxu0 %v86
    %229 = vmatmul.mubr.f32.gmra.mrb[0].mxu0 %v85
    %v230 = vpop.f32.mrb[0].mxu0
    %v231 = vadd.f32 %v162, %v230
    %v232 = vpop.f32.mrb[0].mxu0
    %233 = vmatprep.mubr.f32.mxu0 %v90
    %234 = vmatmul.mubr.f32.gmra.mrb[0].mxu0 %v89
    %v235 = vpop.f32.mrb[0].mxu0
    %v236 = vadd.f32 %v162, %v235
    %v237 = vpop.f32.mrb[0].mxu0
    %238 = vdwg.mxu0
    %239 = vmatprep.subr.mxu0 0.0
    %240 = vmatpush1.msra.mxu0 %v125
    %241 = vmatprep.subr.mxu0 0.0
    %242 = vmatpush1.msra.mxu0 %v126
    %243 = vmatprep.subr.mxu0 0.0
    %244 = vmatpush1.msra.mxu0 %v127
    %245 = vmatprep.subr.mxu0 0.0
    %246 = vmatpush1.msra.mxu0 %v128
    %247 = vmatprep.subr.mxu0 0.0
    %248 = vmatpush1.msra.mxu0 %v129
    %249 = vmatprep.subr.mxu0 0.0
    %250 = vmatpush1.msra.mxu0 %v130
    %251 = vmatprep.subr.mxu0 0.0
    %252 = vmatpush1.msra.mxu0 %v131
    %253 = vmatprep.subr.mxu0 0.0
    %254 = vmatpush1.msra.mxu0 %v132
    %255 = vmatprep.subr.mxu0 0.0
    %256 = vmatpush1.msra.mxu0 %v133
    %257 = vmatprep.subr.mxu0 0.0
    %258 = vmatpush1.msra.mxu0 %v134
    %259 = vmatprep.subr.mxu0 0.0
    %260 = vmatpush1.msra.mxu0 %v135
    %261 = vmatprep.subr.mxu0 0.0
    %262 = vmatpush1.msra.mxu0 %v136
    %263 = vmatprep.subr.mxu0 0.0
    %264 = vmatpush1.msra.mxu0 %v137
    %265 = vmatprep.subr.mxu0 0.0
    %266 = vmatpush1.msra.mxu0 %v138
    %267 = vmatprep.subr.mxu0 0.0
    %268 = vmatpush1.msra.mxu0 %v139
    %269 = vmatprep.subr.mxu0 0.0
    %270 = vmatpush1.msra.mxu0 %v140
    %271 = vmatprep.subr.mxu0 0.0
    %272 = vmatpush1.msra.mxu0 %v141
    %273 = vmatprep.subr.mxu0 0.0
    %274 = vmatpush1.msra.mxu0 %v142
    %275 = vmatprep.subr.mxu0 0.0
    %276 = vmatpush1.msra.mxu0 %v143
    %277 = vmatprep.subr.mxu0 0.0
    %278 = vmatpush1.msra.mxu0 %v144
    %279 = vmatprep.subr.mxu0 0.0
    %280 = vmatpush1.msra.mxu0 %v145
    %281 = vmatprep.subr.mxu0 0.0
    %282 = vmatpush1.msra.mxu0 %v146
    %283 = vmatprep.subr.mxu0 0.0
    %284 = vmatpush1.msra.mxu0 %v147
    %285 = vmatprep.subr.mxu0 0.0
    %286 = vmatpush1.msra.mxu0 %v148
    %287 = vmatprep.subr.mxu0 0.0
    %288 = vmatpush1.msra.mxu0 %v149
    %289 = vmatprep.subr.mxu0 0.0
    %290 = vmatpush1.msra.mxu0 %v150
    %291 = vmatprep.subr.mxu0 0.0
    %292 = vmatpush1.msra.mxu0 %v151
    %293 = vmatprep.subr.mxu0 0.0
    %294 = vmatpush1.msra.mxu0 %v152
    %295 = vmatprep.subr.mxu0 0.0
    %296 = vmatpush1.msra.mxu0 %v153
    %297 = vmatprep.subr.mxu0 0.0
    %298 = vmatpush1.msra.mxu0 %v154
    %299 = vmatprep.subr.mxu0 0.0
    %300 = vmatpush1.msra.mxu0 %v155
    %301 = vmatprep.subr.mxu0 0.0
    %302 = vmatpush1.msra.mxu0 %v156
    %303 = vmatprep.mubr.f32.mxu0 %v88
    %304 = vmatmul.mubr.f32.gmra.mrb[0].mxu0 %v87
    %v305 = vpop.f32.mrb[0].mxu0
    %v306 = vadd.f32 %v231, %v305
    %v307 = vpop.f32.mrb[0].mxu0
    %308 = vmatprep.mubr.f32.mxu0 %v92
    %309 = vmatmul.mubr.f32.gmra.mrb[0].mxu0 %v91
    %v310 = vpop.f32.mrb[0].mxu0
    %v311 = vadd.f32 %v236, %v310
    %v312 = vpop.f32.mrb[0].mxu0
    %313 = vdwg.mxu0
    %v314 = vmax.f32 %v306, 0.0
    %v315 = vmax.f32 %v311, 0.0
    %v316 = vld [vmem:[#allocation8] sm:$0xff]
    %v317 = vld [vmem:[#allocation8 + $0x8] sm:$0xff]
    %v318 = vld [vmem:[#allocation8 + $0x10] sm:$0xff]
    %v319 = vld [vmem:[#allocation8 + $0x18] sm:$0xff]
    %v320 = vld [vmem:[#allocation8 + $0x20] sm:$0xff]
    %v321 = vld [vmem:[#allocation8 + $0x28] sm:$0xff]
    %v322 = vld [vmem:[#allocation8 + $0x30] sm:$0xff]
    %v323 = vld [vmem:[#allocation8 + $0x38] sm:$0xff]
    %v324 = vld [vmem:[#allocation8 + $0x40] sm:$0xff]
    %v325 = vld [vmem:[#allocation8 + $0x48] sm:$0xff]
    %v326 = vld [vmem:[#allocation8 + $0x50] sm:$0xff]
    %v327 = vld [vmem:[#allocation8 + $0x58] sm:$0xff]
    %v328 = vld [vmem:[#allocation8 + $0x60] sm:$0xff]
    %v329 = vld [vmem:[#allocation8 + $0x68] sm:$0xff]
    %v330 = vld [vmem:[#allocation8 + $0x70] sm:$0xff]
    %v331 = vld [vmem:[#allocation8 + $0x78] sm:$0xff]
    %v332 = vld [vmem:[#allocation10] sm:$0x1]
    %v334 = vlaneseq
    %v335 = vshrl.u32 %v334, 7
    %v336 = vsub.s32 0, %v335
    %v337 = vrot.slane %v332, %v336
    %339 = vmatprep.subr.mxu0 0.0
    %340 = vmatpush1.msra.mxu0 %v316
    %341 = vmatprep.subr.mxu0 0.0
    %342 = vmatpush1.msra.mxu0 %v317
    %343 = vmatprep.subr.mxu0 0.0
    %344 = vmatpush1.msra.mxu0 %v318
    %345 = vmatprep.subr.mxu0 0.0
    %346 = vmatpush1.msra.mxu0 %v319
    %347 = vmatprep.subr.mxu0 0.0
    %348 = vmatpush1.msra.mxu0 %v320
    %349 = vmatprep.subr.mxu0 0.0
    %350 = vmatpush1.msra.mxu0 %v321
    %351 = vmatprep.subr.mxu0 0.0
    %352 = vmatpush1.msra.mxu0 %v322
    %353 = vmatprep.subr.mxu0 0.0
    %354 = vmatpush1.msra.mxu0 %v323
    %355 = vmatprep.subr.mxu0 0.0
    %356 = vmatpush1.msra.mxu0 %v324
    %357 = vmatprep.subr.mxu0 0.0
    %358 = vmatpush1.msra.mxu0 %v325
    %359 = vmatprep.subr.mxu0 0.0
    %360 = vmatpush1.msra.mxu0 %v326
    %361 = vmatprep.subr.mxu0 0.0
    %362 = vmatpush1.msra.mxu0 %v327
    %363 = vmatprep.subr.mxu0 0.0
    %364 = vmatpush1.msra.mxu0 %v328
    %365 = vmatprep.subr.mxu0 0.0
    %366 = vmatpush1.msra.mxu0 %v329
    %367 = vmatprep.subr.mxu0 0.0
    %368 = vmatpush1.msra.mxu0 %v330
    %369 = vmatprep.subr.mxu0 0.0
    %370 = vmatpush1.msra.mxu0 %v331
    %371 = vmatprep.subr.mxu0 0.0
    %372 = vmatpush1.msra.mxu0 0.0
    %373 = vmatprep.subr.mxu0 0.0
    %374 = vmatpush1.msra.mxu0 0.0
    %375 = vmatprep.subr.mxu0 0.0
    %376 = vmatpush1.msra.mxu0 0.0
    %377 = vmatprep.subr.mxu0 0.0
    %378 = vmatpush1.msra.mxu0 0.0
    %379 = vmatprep.subr.mxu0 0.0
    %380 = vmatpush1.msra.mxu0 0.0
    %381 = vmatprep.subr.mxu0 0.0
    %382 = vmatpush1.msra.mxu0 0.0
    %383 = vmatprep.subr.mxu0 0.0
    %384 = vmatpush1.msra.mxu0 0.0
    %385 = vmatprep.subr.mxu0 0.0
    %386 = vmatpush1.msra.mxu0 0.0
    %387 = vmatprep.subr.mxu0 0.0
    %388 = vmatpush1.msra.mxu0 0.0
    %389 = vmatprep.subr.mxu0 0.0
    %390 = vmatpush1.msra.mxu0 0.0
    %391 = vmatprep.subr.mxu0 0.0
    %392 = vmatpush1.msra.mxu0 0.0
    %393 = vmatprep.subr.mxu0 0.0
    %394 = vmatpush1.msra.mxu0 0.0
    %395 = vmatprep.subr.mxu0 0.0
    %396 = vmatpush1.msra.mxu0 0.0
    %397 = vmatprep.subr.mxu0 0.0
    %398 = vmatpush1.msra.mxu0 0.0
    %399 = vmatprep.subr.mxu0 0.0
    %400 = vmatpush1.msra.mxu0 0.0
    %401 = vmatprep.subr.mxu0 0.0
    %402 = vmatpush1.msra.mxu0 0.0
    %403 = vmatprep.mubr.f32.mxu0 0.0
    %404 = vmatmul.mubr.f32.gmra.mrb[0].mxu0 %v314
    %v405 = vpop.f32.mrb[0].mxu0
    %v406 = vadd.f32 %v337, %v405
    %v407 = vpop.f32.mrb[0].mxu0
    %408 = vmatprep.mubr.f32.mxu0 0.0
    %409 = vmatmul.mubr.f32.gmra.mrb[0].mxu0 %v315
    %v410 = vpop.f32.mrb[0].mxu0
    %v411 = vadd.f32 %v337, %v410
    %v412 = vpop.f32.mrb[0].mxu0
    %413 = vdwg.mxu0
    %414 = vst [vmem:[#allocation11] sm:$0xff] %v406
    %415 = vst [vmem:[#allocation11 + $0x8] sm:$0xff] %v411
    // Predicated region
    $region42: #{tpu_custom_call.1} parent=1 // pred_check
      _
    $region43: #{tpu_custom_call.1} parent=1 // pred_check_branch
      %417 = sbr.rel (0) target = $region45
    $region44: #{tpu_custom_call.1} parent=1 // pred_region
      %s419 = ssub.s32 256, 256
      %420 = vsyncadd [#allocation4], %s419
      %s421 = sshll.u32 [#allocation11], 4
      %s422 = int_to_ptr.vmem [resolvable:$true] %s421
      %427 = dma.vmem_to_hbm [thread:$0]  %s422, 256, %s5, [#allocation4], 128, 128, 8
    $region45: #{tpu_custom_call.1} parent=1 // pred_fallthru
      _
    // Predicated region
    $region46: #{tpu_custom_call.1} parent=1 // pred_check
      _
    $region47: #{tpu_custom_call.1} parent=1 // pred_check_branch
      %429 = sbr.rel (0) target = $region49
    $region48: #{tpu_custom_call.1} parent=1 // pred_region
      %430 = dma.done [#allocation4], 256
    $region49: #{tpu_custom_call.1} parent=1 // pred_fallthru
      _
    %431 = vsyncpa [#allocation3], 1
    %432 = vsyncpa [#allocation6], 1
    %433 = vsyncpa [#allocation9], 1
    %434 = vsyncpa [#allocation4], 1

</llo_original>
